<compile_context>
chip_gen: v7x
topology: tpu7x:2x2x1
jax: 0.10.0
libtpu: 0.0.40
codegen_flags: <defaults>
</compile_context>

<pallas_src>
import functools

import jax
import jax.numpy as jnp
from jax.experimental import pallas as pl
from jax.experimental.pallas import tpu as pltpu

IN_FEATURES = 52
HIDDEN = 105
HIDDEN_PAD = 128   # lane-dense hidden width
OUT_FEATURES = 3


def _round_up(n, m):
    return ((n + m - 1) // m) * m


def _classifier_kernel(x_ref, w1_ref, b1_ref, w2_ref, b2_ref, o_ref):
    # Hidden layer: (TILE_B, 52) @ (52, 128) + (1, 128)   [128 = padded 105]
    h = jnp.dot(x_ref[...], w1_ref[...], preferred_element_type=jnp.float32)
    h = h + b1_ref[...]
    # LeakyReLU(negative_slope=0.02)
    h = jnp.where(h > 0, h, 0.02 * h)
    # Output layer: (TILE_B, 128) @ (128, 3) + (1, 3)
    y = jnp.dot(h, w2_ref[...], preferred_element_type=jnp.float32)
    y = y + b2_ref[...]
    # Sigmoid: exp on EUP, divide via reciprocal (exact, keeps VALU free)
    o_ref[...] = pl.reciprocal(1.0 + jnp.exp(-y)).astype(o_ref.dtype)


@functools.partial(jax.jit, static_argnames=("tile_b",))
def classifier_forward(x, w1, b1, w2, b2, *, tile_b=1024):
    """x: (B, 52) f32, w1: (52, 105), b1: (1, 105), w2: (105, 3), b2: (1, 3)
    -> (B, 3) f32."""
    B = x.shape[0]

    # --- zero-pad the hidden dim 105 -> 128 (done once, outside the kernel) ---
    w1p = jnp.zeros((IN_FEATURES, HIDDEN_PAD), jnp.float32).at[:, :HIDDEN].set(w1)
    b1p = jnp.zeros((1, HIDDEN_PAD), jnp.float32).at[:, :HIDDEN].set(b1)
    w2p = jnp.zeros((HIDDEN_PAD, OUT_FEATURES), jnp.float32).at[:HIDDEN, :].set(w2)

    # --- batch tiling: multiple of 8 sublanes; pad B up to a tile multiple ---
    tile_b = min(tile_b, _round_up(B, 8))
    tile_b = _round_up(tile_b, 8)
    b_pad = _round_up(B, tile_b)
    xp = x if b_pad == B else jnp.pad(x, ((0, b_pad - B), (0, 0)))

    grid = (b_pad // tile_b,)

    cost = pl.CostEstimate(
        flops=2 * B * (IN_FEATURES * HIDDEN + HIDDEN * OUT_FEATURES),
        transcendentals=B * OUT_FEATURES,
        bytes_accessed=(
            B * (IN_FEATURES + OUT_FEATURES) * 4
            + (w1p.size + b1p.size + w2p.size + b2.size) * 4
        ),
    )

    out = pl.pallas_call(
        _classifier_kernel,
        out_shape=jax.ShapeDtypeStruct((b_pad, OUT_FEATURES), jnp.float32),
        grid_spec=pltpu.PrefetchScalarGridSpec(
            num_scalar_prefetch=0,
            grid=grid,
            in_specs=[
                # x: tiled along batch -> pipelined HBM prefetch per grid step
                pl.BlockSpec((tile_b, IN_FEATURES), lambda i: (i, 0)),
                # weights/biases: constant block index -> stay VMEM-resident
                pl.BlockSpec(w1p.shape, lambda i: (0, 0)),
                pl.BlockSpec(b1p.shape, lambda i: (0, 0)),
                pl.BlockSpec(w2p.shape, lambda i: (0, 0)),
                pl.BlockSpec(b2.shape, lambda i: (0, 0)),
            ],
            out_specs=pl.BlockSpec((tile_b, OUT_FEATURES), lambda i: (i, 0)),
        ),
        compiler_params=pltpu.CompilerParams(
            # batch tiles are independent -> allow megacore split on v7x
            dimension_semantics=("parallel",),
            # explicit limit: safe on v5e (16 MiB default), v6e, v7x (64 MiB phys)
            vmem_limit_bytes=32 * 1024 * 1024,
        ),
        cost_estimate=cost,
    )(xp, w1p, b1p, w2p, b2)

    return out[:B] if b_pad != B else out


def init_params(key):
    """Deterministic init mimicking PyTorch nn.Linear default
    (U[-1/sqrt(fan_in), +1/sqrt(fan_in)])."""
    k1, k2, k3, k4 = jax.random.split(key, 4)
    bound1 = 1.0 / jnp.sqrt(jnp.float32(IN_FEATURES))
    bound2 = 1.0 / jnp.sqrt(jnp.float32(HIDDEN))
    w1 = jax.random.uniform(k1, (IN_FEATURES, HIDDEN), jnp.float32, -bound1, bound1)
    b1 = jax.random.uniform(k2, (1, HIDDEN), jnp.float32, -bound1, bound1)
    w2 = jax.random.uniform(k3, (HIDDEN, OUT_FEATURES), jnp.float32, -bound2, bound2)
    b2 = jax.random.uniform(k4, (1, OUT_FEATURES), jnp.float32, -bound2, bound2)
    return w1, b1, w2, b2


def reference_forward(x, w1, b1, w2, b2):
    """Pure-JAX reference for sanity checking."""
    h = x @ w1 + b1
    h = jnp.where(h > 0, h, 0.02 * h)
    y = h @ w2 + b2
    return 1.0 / (1.0 + jnp.exp(-y))


if __name__ == "__main__":
    key = jax.random.PRNGKey(0)
    kx, kx2, kp = jax.random.split(key, 3)
    w1, b1, w2, b2 = init_params(kp)

    # Case 1: tiny batch (single grid step, tile_b clamps to 8)
    B1 = 8
    x1 = jax.random.normal(kx, (B1, IN_FEATURES), dtype=jnp.float32)
    out1 = jax.block_until_ready(classifier_forward(x1, w1, b1, w2, b2))
    ref1 = reference_forward(x1, w1, b1, w2, b2)
    assert out1.shape == (B1, OUT_FEATURES)
    assert jnp.allclose(out1, ref1, atol=1e-5, rtol=1e-5), "mismatch (B=8)"

    # Case 2: multi-step grid with a remainder tile (exercises batch tiling/pad)
    B2 = 200
    x2 = jax.random.normal(kx2, (B2, IN_FEATURES), dtype=jnp.float32)
    out2 = jax.block_until_ready(classifier_forward(x2, w1, b1, w2, b2, tile_b=64))
    ref2 = reference_forward(x2, w1, b1, w2, b2)
    assert out2.shape == (B2, OUT_FEATURES)
    assert jnp.allclose(out2, ref2, atol=1e-5, rtol=1e-5), "mismatch (B=200)"

    print("KERNEL_OK")
</pallas_src>

<mosaic_0001>
module attributes {stable_mosaic.version = 11 : i64} {
  func.func @_classifier_kernel(%arg0: i32, %arg1: memref<8x52xf32, #tpu.memory_space<vmem>>, %arg2: memref<52x128xf32, #tpu.memory_space<vmem>>, %arg3: memref<1x128xf32, #tpu.memory_space<vmem>>, %arg4: memref<128x3xf32, #tpu.memory_space<vmem>>, %arg5: memref<1x3xf32, #tpu.memory_space<vmem>>, %arg6: memref<8x3xf32, #tpu.memory_space<vmem>>) attributes {dimension_semantics = [#tpu.dimension_semantics<parallel>], iteration_bounds = array<i64: 1>, scalar_prefetch = 0 : i64, scratch_operands = 0 : i64, tpu.core_type = #tpu.core_type<tc>, window_params = [{transform_indices = @transform_0, window_bounds = array<i64: 8, 52>}, {pipeline_mode = #tpu.pipeline_mode<synchronous>, transform_indices = @transform_1, window_bounds = array<i64: 52, 128>}, {pipeline_mode = #tpu.pipeline_mode<synchronous>, transform_indices = @transform_2, window_bounds = array<i64: 1, 128>}, {pipeline_mode = #tpu.pipeline_mode<synchronous>, transform_indices = @transform_3, window_bounds = array<i64: 128, 3>}, {pipeline_mode = #tpu.pipeline_mode<synchronous>, transform_indices = @transform_4, window_bounds = array<i64: 1, 3>}, {transform_indices = @transform_5, window_bounds = array<i64: 8, 3>}]} {
    %c0 = arith.constant 0 : index
    %c0_0 = arith.constant 0 : index
    %0 = vector.load %arg1[%c0, %c0_0] : memref<8x52xf32, #tpu.memory_space<vmem>>, vector<8x52xf32>
    %c0_1 = arith.constant 0 : index
    %c0_2 = arith.constant 0 : index
    %1 = vector.load %arg2[%c0_1, %c0_2] : memref<52x128xf32, #tpu.memory_space<vmem>>, vector<52x128xf32>
    %cst = arith.constant dense<0.000000e+00> : vector<8x128xf32>
    %2 = tpu.matmul %0, %1, %cst {dimension_numbers = #tpu.dot_dimension_numbers<[1], [0], [0], [1], [0, 0, 1, 1], [], []>} : vector<8x52xf32>, vector<52x128xf32>, vector<8x128xf32> -> vector<8x128xf32>
    %c0_3 = arith.constant 0 : index
    %c0_4 = arith.constant 0 : index
    %3 = vector.load %arg3[%c0_3, %c0_4] : memref<1x128xf32, #tpu.memory_space<vmem>>, vector<1x128xf32>
    %4 = vector.broadcast %3 : vector<1x128xf32> to vector<8x128xf32>
    %5 = arith.addf %2, %4 : vector<8x128xf32>
    %cst_5 = arith.constant 0.000000e+00 : f32
    %6 = vector.broadcast %cst_5 : f32 to vector<8x128xf32>
    %7 = arith.cmpf ogt, %5, %6 : vector<8x128xf32>
    %cst_6 = arith.constant 2.000000e-02 : f32
    %8 = vector.broadcast %cst_6 : f32 to vector<8x128xf32>
    %9 = arith.mulf %8, %5 : vector<8x128xf32>
    %10 = arith.select %7, %5, %9 : vector<8x128xi1>, vector<8x128xf32>
    %c0_7 = arith.constant 0 : index
    %c0_8 = arith.constant 0 : index
    %11 = vector.load %arg4[%c0_7, %c0_8] : memref<128x3xf32, #tpu.memory_space<vmem>>, vector<128x3xf32>
    %cst_9 = arith.constant dense<0.000000e+00> : vector<8x3xf32>
    %12 = tpu.matmul %10, %11, %cst_9 {dimension_numbers = #tpu.dot_dimension_numbers<[1], [0], [0], [1], [0, 0, 1, 1], [], []>} : vector<8x128xf32>, vector<128x3xf32>, vector<8x3xf32> -> vector<8x3xf32>
    %c0_10 = arith.constant 0 : index
    %c0_11 = arith.constant 0 : index
    %13 = vector.load %arg5[%c0_10, %c0_11] : memref<1x3xf32, #tpu.memory_space<vmem>>, vector<1x3xf32>
    %14 = vector.broadcast %13 : vector<1x3xf32> to vector<8x3xf32>
    %15 = arith.addf %12, %14 : vector<8x3xf32>
    %cst_12 = arith.constant 0.000000e+00 : f32
    %16 = vector.broadcast %cst_12 : f32 to vector<8x3xf32>
    %17 = arith.subf %16, %15 : vector<8x3xf32>
    %18 = math.exp %17 : vector<8x3xf32>
    %cst_13 = arith.constant 1.000000e+00 : f32
    %19 = vector.broadcast %cst_13 : f32 to vector<8x3xf32>
    %20 = arith.addf %19, %18 : vector<8x3xf32>
    %21 = tpu.reciprocal %20 : vector<8x3xf32> -> vector<8x3xf32>
    %c0_14 = arith.constant 0 : index
    %c0_15 = arith.constant 0 : index
    %22 = vector.load %arg6[%c0_14, %c0_15] : memref<8x3xf32, #tpu.memory_space<vmem>>, vector<8x3xf32>
    tpu.vector_store %arg6[%c0_14, %c0_15], %21 {strides = array<i32>} : memref<8x3xf32, #tpu.memory_space<vmem>>, vector<8x3xf32>,
    return
  }
  func.func @transform_0(%arg0: i32) -> (i32, i32) {
    %c0_i32 = arith.constant 0 : i32
    %c0_i32_0 = arith.constant 0 : i32
    return %arg0, %c0_i32 : i32, i32
  }
  func.func @transform_1(%arg0: i32) -> (i32, i32) {
    %c0_i32 = arith.constant 0 : i32
    %c0_i32_0 = arith.constant 0 : i32
    %c0_i32_1 = arith.constant 0 : i32
    return %c0_i32, %c0_i32_0 : i32, i32
  }
  func.func @transform_2(%arg0: i32) -> (i32, i32) {
    %c0_i32 = arith.constant 0 : i32
    %c0_i32_0 = arith.constant 0 : i32
    %c0_i32_1 = arith.constant 0 : i32
    return %c0_i32, %c0_i32_0 : i32, i32
  }
  func.func @transform_3(%arg0: i32) -> (i32, i32) {
    %c0_i32 = arith.constant 0 : i32
    %c0_i32_0 = arith.constant 0 : i32
    %c0_i32_1 = arith.constant 0 : i32
    return %c0_i32, %c0_i32_0 : i32, i32
  }
  func.func @transform_4(%arg0: i32) -> (i32, i32) {
    %c0_i32 = arith.constant 0 : i32
    %c0_i32_0 = arith.constant 0 : i32
    %c0_i32_1 = arith.constant 0 : i32
    return %c0_i32, %c0_i32_0 : i32, i32
  }
  func.func @transform_5(%arg0: i32) -> (i32, i32) {
    %c0_i32 = arith.constant 0 : i32
    %c0_i32_0 = arith.constant 0 : i32
    return %arg0, %c0_i32 : i32, i32
  }
}

</mosaic_0001>

<llo_original>
// kernel: classifier_forward.1
$region0: #{classifier_forward.1}
  #allocation0 [shape = 'u32[]', space=smem, size = 0x4, offset = 0x4, fixed_abs, tag = 'smem constant byte address 0x4 - core index']
  #allocation1 [shape = 'u32[144,128]{1,0:T(1,128)}', space=vmem, size = 0x12000, scoped, tag = 'internal scratch']
  %s0 = inlined_call_operand.vmem [shape: f32[8,52], index: 0, kind: input, shape index: {}]
  %s1 = inlined_call_operand.vmem [shape: f32[52,128], index: 1, kind: input, shape index: {}]
  %s2 = inlined_call_operand.vmem [shape: f32[1,128], index: 2, kind: input, shape index: {}]
  %s3 = inlined_call_operand.vmem [shape: f32[128,3], index: 3, kind: input, shape index: {}]
  %s4 = inlined_call_operand.vmem [shape: f32[1,3], index: 4, kind: input, shape index: {}]
  %s5 = inlined_call_operand.vmem [shape: f32[8,3], index: 5, kind: output, shape index: {}]
  %s6 = sld [smem:[#allocation0]]
  $region30: #{classifier_forward.1} parent=0
    _
  %s8 = ssub.s32 1, %s6
  %s9 = scalar_select 0, %s8, %s6
  // Predicated region
  $region2: #{classifier_forward.1} parent=0 // pred_check
    _
  $region3: #{classifier_forward.1} parent=0 // pred_check_branch
    %11 = sbr.rel (0) target = $region5
  $region4: #{classifier_forward.1} parent=0 // pred_region
    _
  $region5: #{classifier_forward.1} parent=0 // pred_fallthru
    _
  // Predicated region
  $region6: #{classifier_forward.1} parent=0 // pred_check
    _
  $region7: #{classifier_forward.1} parent=0 // pred_check_branch
    %13 = sbr.rel (0) target = $region9
  $region8: #{classifier_forward.1} parent=0 // pred_region
    _
  $region9: #{classifier_forward.1} parent=0 // pred_fallthru
    _
  // Predicated region
  $region10: #{classifier_forward.1} parent=0 // pred_check
    _
  $region11: #{classifier_forward.1} parent=0 // pred_check_branch
    %15 = sbr.rel (0) target = $region13
  $region12: #{classifier_forward.1} parent=0 // pred_region
    _
  $region13: #{classifier_forward.1} parent=0 // pred_fallthru
    _
  // Predicated region
  $region14: #{classifier_forward.1} parent=0 // pred_check
    _
  $region15: #{classifier_forward.1} parent=0 // pred_check_branch
    %17 = sbr.rel (0) target = $region17
  $region16: #{classifier_forward.1} parent=0 // pred_region
    _
  $region17: #{classifier_forward.1} parent=0 // pred_fallthru
    _
  // Predicated region
  $region18: #{classifier_forward.1} parent=0 // pred_check
    _
  $region19: #{classifier_forward.1} parent=0 // pred_check_branch
    %19 = sbr.rel (0) target = $region21
  $region20: #{classifier_forward.1} parent=0 // pred_region
    _
  $region21: #{classifier_forward.1} parent=0 // pred_fallthru
    _
  %v20 = vld [vmem:[%s0] sm:$0xff]
  %v21 = vld [vmem:[%s1] sm:$0xff]
  %v22 = vld [vmem:[%s1 + $0x8] sm:$0xff]
  %v23 = vld [vmem:[%s1 + $0x10] sm:$0xff]
  %v24 = vld [vmem:[%s1 + $0x18] sm:$0xff]
  %v25 = vld [vmem:[%s1 + $0x20] sm:$0xff]
  %v26 = vld [vmem:[%s1 + $0x28] sm:$0xff]
  %v27 = vld [vmem:[%s1 + $0x30] sm:$0xf]
  %v28 = vld [vmem:[%s2] sm:$0x1]
  %v30 = vlaneseq
  %v31 = vshrl.u32 %v30, 7
  %v32 = vsub.s32 0, %v31
  %v33 = vrot.slane %v28, %v32
  %vm35 = vcmask 424960
  %v37 = vsel %vm35, %v20, 0
  %vm39 = vcmask 1043456
  %v41 = vsel %vm39, %v27, 0
  %43 = vmatprep.subr.mxu0 0.0
  %44 = vmatpush1.msra.mxu0 %v21
  %45 = vmatprep.subr.mxu0 0.0
  %46 = vmatpush1.msra.mxu0 %v22
  %47 = vmatprep.subr.mxu0 0.0
  %48 = vmatpush1.msra.mxu0 %v23
  %49 = vmatprep.subr.mxu0 0.0
  %50 = vmatpush1.msra.mxu0 %v24
  %51 = vmatprep.subr.mxu0 0.0
  %52 = vmatpush1.msra.mxu0 %v25
  %53 = vmatprep.subr.mxu0 0.0
  %54 = vmatpush1.msra.mxu0 %v26
  %55 = vmatprep.subr.mxu0 0.0
  %56 = vmatpush1.msra.mxu0 %v41
  %57 = vmatprep.subr.mxu0 0.0
  %58 = vmatpush1.msra.mxu0 0.0
  %59 = vmatprep.subr.mxu0 0.0
  %60 = vmatpush1.msra.mxu0 0.0
  %61 = vmatprep.subr.mxu0 0.0
  %62 = vmatpush1.msra.mxu0 0.0
  %63 = vmatprep.subr.mxu0 0.0
  %64 = vmatpush1.msra.mxu0 0.0
  %65 = vmatprep.subr.mxu0 0.0
  %66 = vmatpush1.msra.mxu0 0.0
  %67 = vmatprep.subr.mxu0 0.0
  %68 = vmatpush1.msra.mxu0 0.0
  %69 = vmatprep.subr.mxu0 0.0
  %70 = vmatpush1.msra.mxu0 0.0
  %71 = vmatprep.subr.mxu0 0.0
  %72 = vmatpush1.msra.mxu0 0.0
  %73 = vmatprep.subr.mxu0 0.0
  %74 = vmatpush1.msra.mxu0 0.0
  %75 = vmatprep.subr.mxu0 0.0
  %76 = vmatpush1.msra.mxu0 0.0
  %77 = vmatprep.subr.mxu0 0.0
  %78 = vmatpush1.msra.mxu0 0.0
  %79 = vmatprep.subr.mxu0 0.0
  %80 = vmatpush1.msra.mxu0 0.0
  %81 = vmatprep.subr.mxu0 0.0
  %82 = vmatpush1.msra.mxu0 0.0
  %83 = vmatprep.subr.mxu0 0.0
  %84 = vmatpush1.msra.mxu0 0.0
  %85 = vmatprep.subr.mxu0 0.0
  %86 = vmatpush1.msra.mxu0 0.0
  %87 = vmatprep.subr.mxu0 0.0
  %88 = vmatpush1.msra.mxu0 0.0
  %89 = vmatprep.subr.mxu0 0.0
  %90 = vmatpush1.msra.mxu0 0.0
  %91 = vmatprep.subr.mxu0 0.0
  %92 = vmatpush1.msra.mxu0 0.0
  %93 = vmatprep.subr.mxu0 0.0
  %94 = vmatpush1.msra.mxu0 0.0
  %95 = vmatprep.subr.mxu0 0.0
  %96 = vmatpush1.msra.mxu0 0.0
  %97 = vmatprep.subr.mxu0 0.0
  %98 = vmatpush1.msra.mxu0 0.0
  %99 = vmatprep.subr.mxu0 0.0
  %100 = vmatpush1.msra.mxu0 0.0
  %101 = vmatprep.subr.mxu0 0.0
  %102 = vmatpush1.msra.mxu0 0.0
  %103 = vmatprep.subr.mxu0 0.0
  %104 = vmatpush1.msra.mxu0 0.0
  %105 = vmatprep.subr.mxu0 0.0
  %106 = vmatpush1.msra.mxu0 0.0
  %107 = vmatprep.mubr.f32.mxu0 0.0
  %108 = vmatmul.mubr.f32.gmra.mrb[0].mxu0 %v37
  %v109 = vpop.f32.mrb[0].mxu0
  %v110 = vadd.f32 %v33, %v109
  %v111 = vpop.f32.mrb[0].mxu0
  %112 = vdwg.mxu0
  %vm113 = vcmp.gt.f32.partialorder %v110, 0.0
  %v114 = vmul.f32 %v110, 0.02
  %v115 = vsel %vm113, %v110, %v114
  %v116 = vld [vmem:[%s3] sm:$0xff]
  %v117 = vld [vmem:[%s3 + $0x8] sm:$0xff]
  %v118 = vld [vmem:[%s3 + $0x10] sm:$0xff]
  %v119 = vld [vmem:[%s3 + $0x18] sm:$0xff]
  %v120 = vld [vmem:[%s3 + $0x20] sm:$0xff]
  %v121 = vld [vmem:[%s3 + $0x28] sm:$0xff]
  %v122 = vld [vmem:[%s3 + $0x30] sm:$0xff]
  %v123 = vld [vmem:[%s3 + $0x38] sm:$0xff]
  %v124 = vld [vmem:[%s3 + $0x40] sm:$0xff]
  %v125 = vld [vmem:[%s3 + $0x48] sm:$0xff]
  %v126 = vld [vmem:[%s3 + $0x50] sm:$0xff]
  %v127 = vld [vmem:[%s3 + $0x58] sm:$0xff]
  %v128 = vld [vmem:[%s3 + $0x60] sm:$0xff]
  %v129 = vld [vmem:[%s3 + $0x68] sm:$0xff]
  %v130 = vld [vmem:[%s3 + $0x70] sm:$0xff]
  %v131 = vld [vmem:[%s3 + $0x78] sm:$0xff]
  %v132 = vld [vmem:[%s4] sm:$0x1]
  %v134 = vlaneseq
  %v135 = vshrl.u32 %v134, 7
  %v136 = vsub.s32 0, %v135
  %v137 = vrot.slane %v132, %v136
  %139 = vmatprep.subr.mxu0 0.0
  %140 = vmatpush1.msra.mxu0 %v116
  %141 = vmatprep.subr.mxu0 0.0
  %142 = vmatpush1.msra.mxu0 %v117
  %143 = vmatprep.subr.mxu0 0.0
  %144 = vmatpush1.msra.mxu0 %v118
  %145 = vmatprep.subr.mxu0 0.0
  %146 = vmatpush1.msra.mxu0 %v119
  %147 = vmatprep.subr.mxu0 0.0
  %148 = vmatpush1.msra.mxu0 %v120
  %149 = vmatprep.subr.mxu0 0.0
  %150 = vmatpush1.msra.mxu0 %v121
  %151 = vmatprep.subr.mxu0 0.0
  %152 = vmatpush1.msra.mxu0 %v122
  %153 = vmatprep.subr.mxu0 0.0
  %154 = vmatpush1.msra.mxu0 %v123
  %155 = vmatprep.subr.mxu0 0.0
  %156 = vmatpush1.msra.mxu0 %v124
  %157 = vmatprep.subr.mxu0 0.0
  %158 = vmatpush1.msra.mxu0 %v125
  %159 = vmatprep.subr.mxu0 0.0
  %160 = vmatpush1.msra.mxu0 %v126
  %161 = vmatprep.subr.mxu0 0.0
  %162 = vmatpush1.msra.mxu0 %v127
  %163 = vmatprep.subr.mxu0 0.0
  %164 = vmatpush1.msra.mxu0 %v128
  %165 = vmatprep.subr.mxu0 0.0
  %166 = vmatpush1.msra.mxu0 %v129
  %167 = vmatprep.subr.mxu0 0.0
  %168 = vmatpush1.msra.mxu0 %v130
  %169 = vmatprep.subr.mxu0 0.0
  %170 = vmatpush1.msra.mxu0 %v131
  %171 = vmatprep.subr.mxu0 0.0
  %172 = vmatpush1.msra.mxu0 0.0
  %173 = vmatprep.subr.mxu0 0.0
  %174 = vmatpush1.msra.mxu0 0.0
  %175 = vmatprep.subr.mxu0 0.0
  %176 = vmatpush1.msra.mxu0 0.0
  %177 = vmatprep.subr.mxu0 0.0
  %178 = vmatpush1.msra.mxu0 0.0
  %179 = vmatprep.subr.mxu0 0.0
  %180 = vmatpush1.msra.mxu0 0.0
  %181 = vmatprep.subr.mxu0 0.0
  %182 = vmatpush1.msra.mxu0 0.0
  %183 = vmatprep.subr.mxu0 0.0
  %184 = vmatpush1.msra.mxu0 0.0
  %185 = vmatprep.subr.mxu0 0.0
  %186 = vmatpush1.msra.mxu0 0.0
  %187 = vmatprep.subr.mxu0 0.0
  %188 = vmatpush1.msra.mxu0 0.0
  %189 = vmatprep.subr.mxu0 0.0
  %190 = vmatpush1.msra.mxu0 0.0
  %191 = vmatprep.subr.mxu0 0.0
  %192 = vmatpush1.msra.mxu0 0.0
  %193 = vmatprep.subr.mxu0 0.0
  %194 = vmatpush1.msra.mxu0 0.0
  %195 = vmatprep.subr.mxu0 0.0
  %196 = vmatpush1.msra.mxu0 0.0
  %197 = vmatprep.subr.mxu0 0.0
  %198 = vmatpush1.msra.mxu0 0.0
  %199 = vmatprep.subr.mxu0 0.0
  %200 = vmatpush1.msra.mxu0 0.0
  %201 = vmatprep.subr.mxu0 0.0
  %202 = vmatpush1.msra.mxu0 0.0
  %203 = vmatprep.mubr.f32.mxu0 0.0
  %204 = vmatmul.mubr.f32.gmra.mrb[0].mxu0 %v115
  %v205 = vpop.f32.mrb[0].mxu0
  %v206 = vadd.f32 %v137, %v205
  %v207 = vpop.f32.mrb[0].mxu0
  %208 = vdwg.mxu0
  %v209 = vsub.f32 0.0, %v206
  %v210 = vmul.f32 %v209, 1.442695
  %v211 = vpow.pop %v210
  %v212 = vadd.f32 %v211, 1.0
  %v213 = vrcp.pop %v212
  %vm214 = vcmask 23552
  %215 = vst.msk [vmem:[%s5] sm:$0xff] %vm214, %v213
  // Predicated region
  $region22: #{classifier_forward.1} parent=0 // pred_check
    _
  $region23: #{classifier_forward.1} parent=0 // pred_check_branch
    %217 = sbr.rel (0) target = $region25
  $region24: #{classifier_forward.1} parent=0 // pred_region
    _
  $region25: #{classifier_forward.1} parent=0 // pred_fallthru
    _
  // Predicated region
  $region26: #{classifier_forward.1} parent=0 // pred_check
    _
  $region27: #{classifier_forward.1} parent=0 // pred_check_branch
    %219 = sbr.rel (0) target = $region29
  $region28: #{classifier_forward.1} parent=0 // pred_region
    _
  $region29: #{classifier_forward.1} parent=0 // pred_fallthru
    _

</llo_original>
